<compile_context>
chip_gen: v5e
topology: v5e:2x2
jax: 0.10.0
libtpu: 0.0.40
codegen_flags: <defaults>
</compile_context>

<pallas_src>
import functools

import jax
import jax.numpy as jnp
from jax.experimental import pallas as pl
from jax.experimental.pallas import tpu as pltpu


def _round_up(a: int, b: int) -> int:
    return ((a + b - 1) // b) * b


def _softmax_lanes_f32(m):
    """Numerically stable softmax along the lane (last) axis. m: (1, N) f32."""
    m_max = jnp.max(m, axis=-1, keepdims=True)
    e = jnp.exp(m - m_max)
    denom = jnp.sum(e, axis=-1, keepdims=True)
    # exact reciprocal keeps the 1e-5 tolerance
    return e * pl.reciprocal(denom, approx=False)


def _mixed_block_kernel(mix_ref, x_ref, o_ref, *, n: int, k: int):
    """mix_ref: (1, N); x_ref: (TR, K*N) packed rows; o_ref: (TR, K).

    Packed row r holds K original batch rows side by side on the lane axis;
    output element (r, j) = softmax(mix) . x[r*K + j].
    """
    m = mix_ref[...].astype(jnp.float32)                  # (1, N)
    x = x_ref[...].astype(jnp.float32)                    # (TR, K*N)
    p = _softmax_lanes_f32(m)                             # (1, N)
    if k > 1:
        p = jnp.concatenate([p] * k, axis=-1)             # (1, K*N) tiled lanes
    prod = p * x                                          # VPU multiply
    # Segmented lane reduce: one dot per N-wide lane group.
    parts = [
        jnp.sum(prod[:, j * n:(j + 1) * n], axis=-1, keepdims=True)
        for j in range(k)
    ]                                                     # K x (TR, 1)
    o_ref[...] = parts[0] if k == 1 else jnp.concatenate(parts, axis=-1)


def batched_mixed_block(mix: jax.Array, x: jax.Array,
                        *, max_rows_per_block: int = 1024) -> jax.Array:
    """
    mix: (N,) parameter (any float dtype; upcast to f32 inside the kernel).
    x  : (N,)   -> scalar f32  (exact torch forward semantics), or
         (B, N) -> (B,)  f32   (batched: softmax(mix) . x_b per row).
    """
    assert mix.ndim == 1
    n = mix.shape[0]
    mix2 = mix.reshape(1, n)  # native dtype; cast in-kernel

    squeeze_scalar = x.ndim == 1
    if squeeze_scalar:
        assert x.shape == (n,)
        x = x.reshape(1, n)
    assert x.ndim == 2 and x.shape[1] == n
    b = x.shape[0]

    # Lane-dense packing: K original rows per 128-lane packed row when possible.
    if n <= 128 and 128 % n == 0:
        k = 128 // n
    else:
        k = 1
    lane_w = k * n

    rows = _round_up(b, k) // k                       # packed rows needed
    tr = min(max_rows_per_block, _round_up(rows, 8))  # packed rows per block
    rows_pad = _round_up(rows, tr)                    # grid divides exactly
    b_pad = rows_pad * k
    if b_pad > b:
        x = jnp.pad(x, ((0, b_pad - b), (0, 0)))      # zero rows -> dropped later
    x_packed = x.reshape(rows_pad, lane_w)            # free row-major reshape

    grid = (rows_pad // tr,)
    kern = functools.partial(_mixed_block_kernel, n=n, k=k)

    in_bytes = (x_packed.size * x_packed.dtype.itemsize
                + grid[0] * mix2.size * mix2.dtype.itemsize)
    out_bytes = rows_pad * k * 4
    cost = pl.CostEstimate(
        flops=2 * rows_pad * lane_w,
        transcendentals=grid[0] * n,
        bytes_accessed=in_bytes + out_bytes,
    )

    out = pl.pallas_call(
        kern,
        out_shape=jax.ShapeDtypeStruct((rows_pad, k), jnp.float32),
        grid=grid,
        in_specs=[
            pl.BlockSpec((1, n), lambda i: (0, 0)),          # mix: resident
            pl.BlockSpec((tr, lane_w), lambda i: (i, 0)),    # x: tiled over batch
        ],
        out_specs=pl.BlockSpec((tr, k), lambda i: (i, 0)),
        compiler_params=pltpu.CompilerParams(
            dimension_semantics=("parallel",)),
        cost_estimate=cost,
    )(mix2, x_packed)

    out_flat = out.reshape(b_pad)[:b]
    return out_flat[0] if squeeze_scalar else out_flat


if __name__ == "__main__":
    N = 32   # "hardware" size
    B = 8    # batch of input vectors for the batched path

    # Deterministic parameter init (matches torch.ones(hardware)).
    mix = jnp.ones((N,), dtype=jnp.float32)

    key = jax.random.PRNGKey(0)
    k1, k2, k3 = jax.random.split(key, 3)
    x_single = jax.random.normal(k1, (N,), dtype=jnp.float32)
    x_batch = jax.random.normal(k2, (B, N), dtype=jnp.float32)
    x_odd = jax.random.normal(k3, (5, N), dtype=jnp.float32)  # exercises padding

    p_ref = jax.nn.softmax(mix, axis=-1)

    # 1) exact torch forward: 1-D x -> scalar
    out_scalar = jax.block_until_ready(batched_mixed_block(mix, x_single))
    ref_scalar = jnp.dot(p_ref, x_single)
    assert jnp.allclose(out_scalar, ref_scalar, atol=1e-5, rtol=1e-5), (
        out_scalar, ref_scalar)

    # 2) batched variant: (B, N) -> (B,)
    out_batch = jax.block_until_ready(batched_mixed_block(mix, x_batch))
    ref_batch = x_batch @ p_ref
    assert out_batch.shape == (B,)
    assert jnp.allclose(out_batch, ref_batch, atol=1e-5, rtol=1e-5), (
        out_batch, ref_batch)

    # 3) batch size not a multiple of the packing factor (padding path)
    out_odd = jax.block_until_ready(batched_mixed_block(mix, x_odd))
    ref_odd = x_odd @ p_ref
    assert out_odd.shape == (5,)
    assert jnp.allclose(out_odd, ref_odd, atol=1e-5, rtol=1e-5), (
        out_odd, ref_odd)

    print("KERNEL_OK")
</pallas_src>

<mosaic_0001>
module attributes {stable_mosaic.version = 11 : i64} {
  func.func @_mixed_block_kernel(%arg0: i32, %arg1: memref<1x32xf32, #tpu.memory_space<vmem>>, %arg2: memref<8x128xf32, #tpu.memory_space<vmem>>, %arg3: memref<8x4xf32, #tpu.memory_space<vmem>>) attributes {dimension_semantics = [#tpu.dimension_semantics<parallel>], iteration_bounds = array<i64: 1>, scalar_prefetch = 0 : i64, scratch_operands = 0 : i64, tpu.core_type = #tpu.core_type<tc>, window_params = [{pipeline_mode = #tpu.pipeline_mode<synchronous>, transform_indices = @transform_0, window_bounds = array<i64: 1, 32>}, {transform_indices = @transform_1, window_bounds = array<i64: 8, 128>}, {transform_indices = @transform_2, window_bounds = array<i64: 8, 4>}]} {
    %c0 = arith.constant 0 : index
    %c0_0 = arith.constant 0 : index
    %0 = vector.load %arg1[%c0, %c0_0] : memref<1x32xf32, #tpu.memory_space<vmem>>, vector<1x32xf32>
    %c0_1 = arith.constant 0 : index
    %c0_2 = arith.constant 0 : index
    %1 = vector.load %arg2[%c0_1, %c0_2] : memref<8x128xf32, #tpu.memory_space<vmem>>, vector<8x128xf32>
    %cst = arith.constant dense<0xFF800000> : vector<1xf32>
    %2 = vector.multi_reduction <maximumf>, %0, %cst [1] : vector<1x32xf32> to vector<1xf32>
    %3 = vector.shape_cast %2 : vector<1xf32> to vector<1x1xf32>
    %4 = vector.broadcast %3 : vector<1x1xf32> to vector<1x32xf32>
    %5 = arith.subf %0, %4 : vector<1x32xf32>
    %6 = math.exp %5 : vector<1x32xf32>
    %cst_3 = arith.constant dense<0.000000e+00> : vector<1xf32>
    %7 = vector.multi_reduction <add>, %6, %cst_3 [1] : vector<1x32xf32> to vector<1xf32>
    %8 = vector.shape_cast %7 : vector<1xf32> to vector<1x1xf32>
    %9 = tpu.reciprocal %8 : vector<1x1xf32> -> vector<1x1xf32>
    %10 = vector.broadcast %9 : vector<1x1xf32> to vector<1x32xf32>
    %11 = arith.mulf %6, %10 : vector<1x32xf32>
    %12 = tpu.concatenate %11, %11, %11, %11 in 1 : vector<1x32xf32>, vector<1x32xf32>, vector<1x32xf32>, vector<1x32xf32> -> vector<1x128xf32>
    %13 = vector.broadcast %12 : vector<1x128xf32> to vector<8x128xf32>
    %14 = arith.mulf %13, %1 : vector<8x128xf32>
    %15 = vector.extract_strided_slice %14 {offsets = [0, 0], sizes = [8, 32], strides = [1, 1]} : vector<8x128xf32> to vector<8x32xf32>
    %cst_4 = arith.constant dense<0.000000e+00> : vector<8xf32>
    %16 = vector.multi_reduction <add>, %15, %cst_4 [1] : vector<8x32xf32> to vector<8xf32>
    %17 = vector.shape_cast %16 : vector<8xf32> to vector<8x1xf32>
    %18 = vector.extract_strided_slice %14 {offsets = [0, 32], sizes = [8, 32], strides = [1, 1]} : vector<8x128xf32> to vector<8x32xf32>
    %cst_5 = arith.constant dense<0.000000e+00> : vector<8xf32>
    %19 = vector.multi_reduction <add>, %18, %cst_5 [1] : vector<8x32xf32> to vector<8xf32>
    %20 = vector.shape_cast %19 : vector<8xf32> to vector<8x1xf32>
    %21 = vector.extract_strided_slice %14 {offsets = [0, 64], sizes = [8, 32], strides = [1, 1]} : vector<8x128xf32> to vector<8x32xf32>
    %cst_6 = arith.constant dense<0.000000e+00> : vector<8xf32>
    %22 = vector.multi_reduction <add>, %21, %cst_6 [1] : vector<8x32xf32> to vector<8xf32>
    %23 = vector.shape_cast %22 : vector<8xf32> to vector<8x1xf32>
    %24 = vector.extract_strided_slice %14 {offsets = [0, 96], sizes = [8, 32], strides = [1, 1]} : vector<8x128xf32> to vector<8x32xf32>
    %cst_7 = arith.constant dense<0.000000e+00> : vector<8xf32>
    %25 = vector.multi_reduction <add>, %24, %cst_7 [1] : vector<8x32xf32> to vector<8xf32>
    %26 = vector.shape_cast %25 : vector<8xf32> to vector<8x1xf32>
    %27 = tpu.concatenate %17, %20, %23, %26 in 1 : vector<8x1xf32>, vector<8x1xf32>, vector<8x1xf32>, vector<8x1xf32> -> vector<8x4xf32>
    %c0_8 = arith.constant 0 : index
    %c0_9 = arith.constant 0 : index
    %28 = vector.load %arg3[%c0_8, %c0_9] : memref<8x4xf32, #tpu.memory_space<vmem>>, vector<8x4xf32>
    tpu.vector_store %arg3[%c0_8, %c0_9], %27 {strides = array<i32>} : memref<8x4xf32, #tpu.memory_space<vmem>>, vector<8x4xf32>,
    return
  }
  func.func @transform_0(%arg0: i32) -> (i32, i32) {
    %c0_i32 = arith.constant 0 : i32
    %c0_i32_0 = arith.constant 0 : i32
    %c0_i32_1 = arith.constant 0 : i32
    return %c0_i32, %c0_i32_0 : i32, i32
  }
  func.func @transform_1(%arg0: i32) -> (i32, i32) {
    %c0_i32 = arith.constant 0 : i32
    %c0_i32_0 = arith.constant 0 : i32
    return %arg0, %c0_i32 : i32, i32
  }
  func.func @transform_2(%arg0: i32) -> (i32, i32) {
    %c0_i32 = arith.constant 0 : i32
    %c0_i32_0 = arith.constant 0 : i32
    return %arg0, %c0_i32 : i32, i32
  }
}

</mosaic_0001>

<llo_original>
// kernel: tpu_custom_call.1
$region0: #{tpu_custom_call.1}
  #allocation0 [shape = 'u32[]', space=smem, size = 0x4, offset = 0x4, fixed_abs, tag = 'smem constant byte address 0x4 - core index']
  #allocation1 [shape = 'u32[72,128]{1,0:T(1,128)}', space=vmem, size = 0x9000, scoped, tag = 'internal scratch']
  %s0 = inlined_call_operand.hbm [shape: f32[1,32], index: 0, kind: input, shape index: {}]
  %s1 = inlined_call_operand.hbm [shape: f32[8,128], index: 1, kind: input, shape index: {}]
  %s2 = inlined_call_operand.vmem [shape: f32[8,4], index: 2, kind: output, shape index: {}]
  %s3 = sld [smem:[#allocation0]]
  $region26: #{tpu_custom_call.1} parent=0
    _
  %s5 = ssub.s32 1, %s3
  %s6 = scalar_select 0, %s5, %s3
  $region1: #{tpu_custom_call.1} parent=0
    #allocation2 [shape = 'u8[512]{0}', space=vmem, size = 0x400, scoped, tag = 'input window, operand 0, single buffered']
    #allocation3 [shape = 's32[1]{0}', space=sflag, size = 0x4, scoped, tag = 'scoped memory for tpu_custom_call.1']
    #allocation4 [shape = 'u8[4096]{0}', space=vmem, size = 0x1000, scoped, tag = 'input window, operand 1, single buffered']
    #allocation5 [shape = 's32[1]{0}', space=sflag, size = 0x4, scoped, tag = 'scoped memory for tpu_custom_call.1']
    %7 = vsyncpa [#allocation3], 0
    %8 = vsyncpa [#allocation5], 0
    // Predicated region
    $region2: #{tpu_custom_call.1} parent=1 // pred_check
      _
    $region3: #{tpu_custom_call.1} parent=1 // pred_check_branch
      %10 = sbr.rel (0) target = $region5
    $region4: #{tpu_custom_call.1} parent=1 // pred_region
      %12 = vsyncadd [#allocation3], 0
      %s14 = sshll.u32 %s0, 4
      %s15 = int_to_ptr.hbm [resolvable:$true] %s14
      %s16 = sshll.u32 [#allocation2], 4
      %s17 = int_to_ptr.vmem [resolvable:$true] %s16
      %19 = dma.hbm_to_vmem [thread:$0]  %s15, 16, %s17, [#allocation3]
    $region5: #{tpu_custom_call.1} parent=1 // pred_fallthru
      _
    // Predicated region
    $region6: #{tpu_custom_call.1} parent=1 // pred_check
      _
    $region7: #{tpu_custom_call.1} parent=1 // pred_check_branch
      %21 = sbr.rel (0) target = $region9
    $region8: #{tpu_custom_call.1} parent=1 // pred_region
      %23 = vsyncadd [#allocation5], 0
      %s25 = sshll.u32 %s1, 4
      %s26 = int_to_ptr.hbm [resolvable:$true] %s25
      %s27 = sshll.u32 [#allocation4], 4
      %s28 = int_to_ptr.vmem [resolvable:$true] %s27
      %30 = dma.hbm_to_vmem [thread:$0]  %s26, 128, %s28, [#allocation5]
    $region9: #{tpu_custom_call.1} parent=1 // pred_fallthru
      _
    // Predicated region
    $region10: #{tpu_custom_call.1} parent=1 // pred_check
      _
    $region11: #{tpu_custom_call.1} parent=1 // pred_check_branch
      %32 = sbr.rel (0) target = $region13
    $region12: #{tpu_custom_call.1} parent=1 // pred_region
      %34 = dma.done [#allocation3], 16
    $region13: #{tpu_custom_call.1} parent=1 // pred_fallthru
      _
    // Predicated region
    $region14: #{tpu_custom_call.1} parent=1 // pred_check
      _
    $region15: #{tpu_custom_call.1} parent=1 // pred_check_branch
      %36 = sbr.rel (0) target = $region17
    $region16: #{tpu_custom_call.1} parent=1 // pred_region
      %38 = dma.done [#allocation5], 128
    $region17: #{tpu_custom_call.1} parent=1 // pred_fallthru
      _
    %v39 = vld [vmem:[#allocation2] sm:$0x1]
    %v40 = vld [vmem:[#allocation4] sm:$0xff]
    %vm41 = vcmask 253952
    %v42 = vsel %vm41, %v39, -inf
    %43 = vmax.xlane.f32.xlu0 %v42
    %v44 = vpop.xlane.xlu0 %43
    %v45 = vsub.f32 %v39, %v44
    %v46 = vmul.f32 %v45, 1.442695
    %v47 = vpow.pop %v46
    %v48 = vsel %vm41, %v47, 0.0
    %49 = vadd.xlane.f32.xlu0 %v48
    %v50 = vpop.xlane.xlu0 %49
    %v51 = vrcp.pop %v50
    %v52 = vmul.f32 %v50, %v51
    %v53 = vsub.f32 1.0, %v52
    %v54 = vmul.f32 %v51, %v53
    %v55 = vadd.f32 %v51, %v54
    %vm56 = vweird.f32 %v50
    %vm57 = vweird.f32 %v51
    %vm58 = vmor %vm56, %vm57
    %v59 = vsel %vm58, %v51, %v55
    %v60 = vand.u32 2147483647, %v50
    %vm61 = vcmp.eq.f32.partialorder %v60, 8.507059e+37
    %v62 = vand.u32 %v50, 2147483648
    %v63 = vor.u32 1.1754944e-38, %v62
    %v64 = vsel %vm61, %v63, %v59
    %v65 = vmul.f32 %v47, %v64
    %v67 = vperm.slane %v65, 0
    %68 = vrot.lane.b32.xlu0 %v67, 32
    %v69 = vpop.permute.xlu0 %68
    %71 = vrot.lane.b32.xlu0 %v67, 64
    %v72 = vpop.permute.xlu0 %71
    %74 = vrot.lane.b32.xlu0 %v67, 96
    %v75 = vpop.permute.xlu0 %74
    %vm77 = vcmask 261120
    %v78 = vsel %vm77, %v65, %v69
    %vm79 = vcmask 523264
    %v80 = vsel %vm79, %v78, %v72
    %vm81 = vcmask 785408
    %v82 = vsel %vm81, %v80, %v75
    %v83 = vperm.slane %v82, 0
    %v84 = vmul.f32 %v83, %v40
    %v85 = vsel %vm77, %v84, 0.0
    %86 = vadd.xlane.f32.xlu0 %v85
    %v87 = vpop.xlane.xlu0 %86
    %89 = vrot.lane.b32.xlu0 %v84, 96
    %v90 = vpop.permute.xlu0 %89
    %v92 = vsel %vm77, %v90, 0.0
    %93 = vadd.xlane.f32.xlu0 %v92
    %v94 = vpop.xlane.xlu0 %93
    %95 = vrot.lane.b32.xlu0 %v84, 64
    %v96 = vpop.permute.xlu0 %95
    %v98 = vsel %vm77, %v96, 0.0
    %99 = vadd.xlane.f32.xlu0 %v98
    %v100 = vpop.xlane.xlu0 %99
    %101 = vrot.lane.b32.xlu0 %v84, 32
    %v102 = vpop.permute.xlu0 %101
    %v104 = vsel %vm77, %v102, 0.0
    %105 = vadd.xlane.f32.xlu0 %v104
    %v106 = vpop.xlane.xlu0 %105
    %vm107 = vcmask 7168
    %v108 = vsel %vm107, %v87, %v94
    %vm109 = vcmask 15360
    %v110 = vsel %vm109, %v108, %v100
    %vm111 = vcmask 23552
    %v112 = vsel %vm111, %v110, %v106
    %vm113 = vcmask 31744
    %114 = vst.msk [vmem:[%s2] sm:$0xff] %vm113, %v112
    // Predicated region
    $region18: #{tpu_custom_call.1} parent=1 // pred_check
      _
    $region19: #{tpu_custom_call.1} parent=1 // pred_check_branch
      %116 = sbr.rel (0) target = $region21
    $region20: #{tpu_custom_call.1} parent=1 // pred_region
      _
    $region21: #{tpu_custom_call.1} parent=1 // pred_fallthru
      _
    // Predicated region
    $region22: #{tpu_custom_call.1} parent=1 // pred_check
      _
    $region23: #{tpu_custom_call.1} parent=1 // pred_check_branch
      %118 = sbr.rel (0) target = $region25
    $region24: #{tpu_custom_call.1} parent=1 // pred_region
      _
    $region25: #{tpu_custom_call.1} parent=1 // pred_fallthru
      _
    %119 = vsyncpa [#allocation3], 1
    %120 = vsyncpa [#allocation5], 1

</llo_original>
